<compile_context>
chip_gen: v7x
topology: tpu7x:2x2x1
jax: 0.10.0
libtpu: 0.0.40
codegen_flags: <defaults>
</compile_context>

<pallas_src>
import functools

import jax
import jax.numpy as jnp
from jax.experimental import pallas as pl
from jax.experimental.pallas import tpu as pltpu

EPS = 1e-12
_LANE = 128
_DEFAULT_VMEM_BYTES = 64 * 1024 * 1024   # conservative: v7x physical VMEM


def _l2_norm_kernel(x_ref, o_ref, *, eps):
    x = x_ref[...]
    # Fuse the f32 upcast into the reduction (no named full-tile f32 temp);
    # f32 accumulation is kept (mandatory on v5e: no bf16 VALU).
    sumsq = jnp.sum(jnp.square(x.astype(jnp.float32)), axis=-1, keepdims=True)
    # max(||x||, eps) == sqrt(max(sumsq, eps^2)); eps^2 = 1e-24 is a normal f32.
    inv = jax.lax.rsqrt(jnp.maximum(sumsq, eps * eps))          # (tb, 1), EUP
    # Per-vreg promotion of x * inv (f32), cast back to output dtype on store.
    o_ref[...] = (x * inv).astype(o_ref.dtype)


def _round_up(x, m):
    return ((x + m - 1) // m) * m


def _sublane_multiple(dtype):
    itemsize = jnp.dtype(dtype).itemsize
    return {4: 8, 2: 16, 1: 32}.get(itemsize, 8)


def _tpu_budget():
    """(physical VMEM bytes, TensorCores per chip) with safe fallbacks."""
    vmem = _DEFAULT_VMEM_BYTES
    cores = None
    try:
        info = pltpu.get_tpu_info()
        vmem = int(getattr(info, "vmem_capacity_bytes", vmem))
        for name in ("num_cores", "core_count", "num_tensorcores",
                     "tensorcore_count"):
            val = getattr(info, name, None)
            if val is not None:
                cores = int(val)
                break
    except Exception:
        pass
    if cores is None or cores < 1:
        # Heuristic: 64 MiB parts (v7x) have 2 TCs/chip; 128 MiB parts have 1.
        cores = 2 if vmem <= 64 * 1024 * 1024 else 1
    return vmem, cores


def _pick_row_tile(B, D_pad, dtype, target_bytes, num_cores):
    """Sublane-aligned row tile sized to ~target_bytes per buffer."""
    itemsize = jnp.dtype(dtype).itemsize
    sub = _sublane_multiple(dtype)
    tb = max(sub, target_bytes // max(1, D_pad * itemsize))
    if num_cores > 1 and B > sub:
        # Keep >= 2 grid steps per TensorCore so each core keeps its
        # prefetch/writeback overlap and the batch axis shards across cores.
        min_steps = 2 * num_cores
        cap = _round_up(pl.cdiv(B, min_steps), sub)
        tb = min(tb, cap)
    tb = max(sub, (tb // sub) * sub)                 # sublane-aligned
    if tb >= B:
        return B                                     # full-extent block (legal)
    return tb


def l2_norm_layer(x, *, dim=1, eps=EPS):
    """Pallas equivalent of L2_Norm_Layer(dim=1, eps=1e-12).forward(x).

    x: (B, D) array; normalization along the feature axis (dim == 1).
    """
    assert x.ndim == 2 and dim in (1, -1), "kernel handles (B, D) with dim=1"
    B, D = x.shape
    dtype = x.dtype
    itemsize = jnp.dtype(dtype).itemsize
    sub = _sublane_multiple(dtype)

    vmem_bytes, num_cores = _tpu_budget()
    vmem_limit = (vmem_bytes * 3) // 4               # 48 MiB v7x / 96 MiB v5e,v6e
    target_block_bytes = max(512 * 1024, vmem_limit // 6)

    # Lane-dense output: zero-pad the feature dim to a multiple of 128; padded
    # lanes are zero so they contribute nothing to sum(x^2).
    D_pad = _round_up(D, _LANE)
    x_in = x if D_pad == D else jnp.pad(x, ((0, 0), (0, D_pad - D)))

    # Wide-D guard: one sublane-minimum block per (double-buffered in + out)
    # must fit the VMEM budget.
    # TODO(synk): add an 'arbitrary' D grid axis with a per-row sum-of-squares
    # accumulator (two-pass normalize) for feature dims beyond this limit.
    min_block_bytes = sub * D_pad * itemsize
    if 4 * min_block_bytes > vmem_limit:
        raise NotImplementedError(
            "L2 norm feature dim too wide for a single-block row tile on this "
            f"chip (needs {4 * min_block_bytes} B, budget {vmem_limit} B)")

    tb = _pick_row_tile(B, D_pad, dtype, target_block_bytes, num_cores)
    grid = (pl.cdiv(B, tb),)

    kernel = functools.partial(_l2_norm_kernel, eps=eps)

    out = pl.pallas_call(
        kernel,
        out_shape=jax.ShapeDtypeStruct((B, D_pad), dtype),
        grid_spec=pltpu.PrefetchScalarGridSpec(
            num_scalar_prefetch=0,
            grid=grid,
            in_specs=[pl.BlockSpec((tb, D_pad), lambda i: (i, 0))],
            out_specs=pl.BlockSpec((tb, D_pad), lambda i: (i, 0)),
        ),
        compiler_params=pltpu.CompilerParams(
            dimension_semantics=("parallel",),
            vmem_limit_bytes=vmem_limit,
        ),
    )(x_in)

    if D_pad != D:
        out = out[:, :D]
    return out


if __name__ == "__main__":
    key = jax.random.PRNGKey(0)

    # Small embedding-style input: batch=8, hidden=32 (exercises the D-padding
    # path since 32 is not a multiple of 128).
    B, D = 8, 32
    x = jax.random.normal(key, (B, D), dtype=jnp.float32)
    out = jax.block_until_ready(l2_norm_layer(x, dim=1, eps=EPS))

    norm = jnp.sqrt(jnp.sum(x * x, axis=1, keepdims=True))
    ref = x / jnp.maximum(norm, EPS)
    assert out.shape == x.shape and out.dtype == x.dtype
    assert jnp.max(jnp.abs(out - ref)) < 1e-5

    # Lane-dense path + tail block: batch not a multiple of the row tile.
    x2 = jax.random.normal(jax.random.PRNGKey(0), (20, 128), dtype=jnp.float32)
    out2 = jax.block_until_ready(l2_norm_layer(x2, dim=1, eps=EPS))
    norm2 = jnp.sqrt(jnp.sum(x2 * x2, axis=1, keepdims=True))
    ref2 = x2 / jnp.maximum(norm2, EPS)
    assert out2.shape == x2.shape
    assert jnp.max(jnp.abs(out2 - ref2)) < 1e-5

    # bf16 path: checks the fused-upcast reduction + per-vreg promoted scale.
    x3 = jax.random.normal(jax.random.PRNGKey(1), (24, 256)).astype(jnp.bfloat16)
    out3 = jax.block_until_ready(l2_norm_layer(x3, dim=1, eps=EPS))
    x3f = x3.astype(jnp.float32)
    ref3 = x3f / jnp.maximum(
        jnp.sqrt(jnp.sum(x3f * x3f, axis=1, keepdims=True)), EPS)
    assert out3.shape == x3.shape and out3.dtype == x3.dtype
    assert jnp.max(jnp.abs(out3.astype(jnp.float32) - ref3)) < 1e-2

    print("KERNEL_OK")
</pallas_src>

<mosaic_0001>
module attributes {stable_mosaic.version = 11 : i64} {
  func.func @_l2_norm_kernel(%arg0: i32, %arg1: memref<8x128xf32, #tpu.memory_space<vmem>>, %arg2: memref<8x128xf32, #tpu.memory_space<vmem>>) attributes {dimension_semantics = [#tpu.dimension_semantics<parallel>], iteration_bounds = array<i64: 1>, scalar_prefetch = 0 : i64, scratch_operands = 0 : i64, tpu.core_type = #tpu.core_type<tc>, window_params = [{transform_indices = @transform_0, window_bounds = array<i64: 8, 128>}, {transform_indices = @transform_1, window_bounds = array<i64: 8, 128>}]} {
    %c0 = arith.constant 0 : index
    %c0_0 = arith.constant 0 : index
    %0 = vector.load %arg1[%c0, %c0_0] : memref<8x128xf32, #tpu.memory_space<vmem>>, vector<8x128xf32>
    %1 = arith.mulf %0, %0 : vector<8x128xf32>
    %cst = arith.constant dense<0.000000e+00> : vector<8xf32>
    %2 = vector.multi_reduction <add>, %1, %cst [1] : vector<8x128xf32> to vector<8xf32>
    %3 = vector.shape_cast %2 : vector<8xf32> to vector<8x1xf32>
    %cst_1 = arith.constant 1.000000e-24 : f32
    %4 = vector.broadcast %cst_1 : f32 to vector<8x1xf32>
    %5 = arith.maximumf %3, %4 : vector<8x1xf32>
    %6 = math.rsqrt %5 : vector<8x1xf32>
    %7 = vector.broadcast %6 : vector<8x1xf32> to vector<8x128xf32>
    %8 = arith.mulf %0, %7 : vector<8x128xf32>
    %c0_2 = arith.constant 0 : index
    %c0_3 = arith.constant 0 : index
    %9 = vector.load %arg2[%c0_2, %c0_3] : memref<8x128xf32, #tpu.memory_space<vmem>>, vector<8x128xf32>
    tpu.vector_store %arg2[%c0_2, %c0_3], %8 {strides = array<i32>} : memref<8x128xf32, #tpu.memory_space<vmem>>, vector<8x128xf32>,
    return
  }
  func.func @transform_0(%arg0: i32) -> (i32, i32) {
    %c0_i32 = arith.constant 0 : i32
    %c0_i32_0 = arith.constant 0 : i32
    return %arg0, %c0_i32 : i32, i32
  }
  func.func @transform_1(%arg0: i32) -> (i32, i32) {
    %c0_i32 = arith.constant 0 : i32
    %c0_i32_0 = arith.constant 0 : i32
    return %arg0, %c0_i32 : i32, i32
  }
}

</mosaic_0001>

<llo_original>
// kernel: tpu_custom_call.1
$region0: #{tpu_custom_call.1}
  #allocation0 [shape = 'u32[]', space=smem, size = 0x4, offset = 0x4, fixed_abs, tag = 'smem constant byte address 0x4 - core index']
  #allocation1 [shape = 'u32[144,128]{1,0:T(1,128)}', space=vmem, size = 0x12000, scoped, tag = 'internal scratch']
  %s0 = inlined_call_operand.hbm [shape: f32[8,128], index: 0, kind: input, shape index: {}]
  %s1 = inlined_call_operand.hbm [shape: f32[8,128], index: 1, kind: output, shape index: {}]
  %s2 = sld [smem:[#allocation0]]
  $region18: #{tpu_custom_call.1} parent=0
    _
  %s4 = ssub.s32 1, %s2
  %s5 = scalar_select 0, %s4, %s2
  $region1: #{tpu_custom_call.1} parent=0
    #allocation2 [shape = 'u8[4096]{0}', space=vmem, size = 0x1000, scoped, tag = 'input window, operand 0, single buffered']
    #allocation3 [shape = 's32[1]{0}', space=sflag, size = 0x4, scoped, tag = 'scoped memory for tpu_custom_call.1']
    #allocation4 [shape = 's32[1]{0}', space=sflag, size = 0x4, scoped, tag = 'scoped memory for tpu_custom_call.1']
    #allocation5 [shape = 'u8[4096]{0}', space=vmem, size = 0x1000, scoped, tag = 'output window, operand 0, single buffered']
    %6 = vsyncpa [#allocation3], 0
    %7 = vsyncpa [#allocation4], 0
    // Predicated region
    $region2: #{tpu_custom_call.1} parent=1 // pred_check
      _
    $region3: #{tpu_custom_call.1} parent=1 // pred_check_branch
      %9 = sbr.rel (0) target = $region5
    $region4: #{tpu_custom_call.1} parent=1 // pred_region
      %s11 = ssub.s32 128, 128
      %12 = vsyncadd [#allocation3], %s11
      %s14 = sshll.u32 [#allocation2], 4
      %s15 = int_to_ptr.vmem [resolvable:$true] %s14
      %17 = dma.hbm_to_vmem [thread:$0]  %s0, 128, %s15, [#allocation3]
    $region5: #{tpu_custom_call.1} parent=1 // pred_fallthru
      _
    // Predicated region
    $region6: #{tpu_custom_call.1} parent=1 // pred_check
      _
    $region7: #{tpu_custom_call.1} parent=1 // pred_check_branch
      %19 = sbr.rel (0) target = $region9
    $region8: #{tpu_custom_call.1} parent=1 // pred_region
      %20 = dma.done [#allocation3], 128
    $region9: #{tpu_custom_call.1} parent=1 // pred_fallthru
      _
    %v21 = vld [vmem:[#allocation2] sm:$0xff]
    %v22 = vmul.f32 %v21, %v21
    %23 = vadd.xlane.f32.xlu0 %v22
    %v24 = vpop.xlane.xlu0 %23
    %v25 = vmax.f32 %v24, 1e-24
    %v26 = vrsqrt.pop %v25
    %v27 = vmul.f32 %v21, %v26
    %28 = vst [vmem:[#allocation5] sm:$0xff] %v27
    // Predicated region
    $region10: #{tpu_custom_call.1} parent=1 // pred_check
      _
    $region11: #{tpu_custom_call.1} parent=1 // pred_check_branch
      %30 = sbr.rel (0) target = $region13
    $region12: #{tpu_custom_call.1} parent=1 // pred_region
      %s32 = ssub.s32 128, 128
      %33 = vsyncadd [#allocation4], %s32
      %s35 = sshll.u32 [#allocation5], 4
      %s36 = int_to_ptr.vmem [resolvable:$true] %s35
      %38 = dma.vmem_to_hbm [thread:$0]  %s36, 128, %s1, [#allocation4]
    $region13: #{tpu_custom_call.1} parent=1 // pred_fallthru
      _
    // Predicated region
    $region14: #{tpu_custom_call.1} parent=1 // pred_check
      _
    $region15: #{tpu_custom_call.1} parent=1 // pred_check_branch
      %40 = sbr.rel (0) target = $region17
    $region16: #{tpu_custom_call.1} parent=1 // pred_region
      %41 = dma.done [#allocation4], 128
    $region17: #{tpu_custom_call.1} parent=1 // pred_fallthru
      _
    %42 = vsyncpa [#allocation3], 1
    %43 = vsyncpa [#allocation4], 1

</llo_original>
